<compile_context>
chip_gen: v7x
topology: tpu7x:2x2x1
jax: 0.10.0
libtpu: 0.0.40
codegen_flags: <defaults>
</compile_context>

<pallas_src>
import math

import jax
import jax.numpy as jnp
from jax.experimental import pallas as pl
from jax.experimental.pallas import tpu as pltpu


_VMEM_BUDGET = 24 * 1024 * 1024  # conservative headroom vs v7x's 64 MiB physical


def _round_up(x, m):
    return ((x + m - 1) // m) * m


def _vae_head_kernel(x_ref, w_ref, b_ref, o_ref):
    # x_ref: [tB, D] f32 (per-tile)   w_ref: [D, Np] f32 (grid-resident)
    # b_ref: [1, Np] f32 (resident)   o_ref: [tB, Np] f32
    # Single-shot dot per batch tile; bias folded into the same statement so
    # there is exactly one writeback per tile and no scratch accumulator.
    o_ref[...] = b_ref[...] + jnp.dot(
        x_ref[...], w_ref[...], preferred_element_type=jnp.float32
    )


def prepare_vae_head_params(w, b):
    """Pad parameters to a lane-dense output width once (init-time cost)."""
    D, N = w.shape
    Np = _round_up(N, 128)
    w_p = jnp.zeros((D, Np), jnp.float32).at[:, :N].set(w.astype(jnp.float32))
    b_p = jnp.zeros((1, Np), jnp.float32).at[0, :N].set(b.astype(jnp.float32))
    return w_p, b_p


def _pick_batch_tile(B, D, Np):
    # VMEM: resident W + bias, plus double-buffered x tile and out tile (f32).
    fixed = D * Np * 4 + Np * 4
    per_row = 2 * 4 * (D + Np)
    max_rows = max(8, (_VMEM_BUDGET - fixed) // per_row)
    if B <= max_rows and B <= 512:
        return B  # whole batch in one tile (block == full array dim, no pad)
    tB = min(512, max_rows)
    return max(8, (tB // 8) * 8)  # multiple of 8 sublanes; partial last tile OK


def vae_component_forward(x, w_p, b_p, out_dim):
    """Forward pass: returns (mu, logvar), each [B, out_dim].

    x:   [B, *data_dim] float32
    w_p: [D, Np] float32 (from prepare_vae_head_params)
    b_p: [1, Np] float32 (from prepare_vae_head_params)
    """
    B = x.shape[0]
    D = math.prod(x.shape[1:])
    Np = w_p.shape[1]
    N = 2 * out_dim

    x_flat = x.reshape(B, D).astype(jnp.float32)  # matches torch x.view(B, -1)

    tB = _pick_batch_tile(B, D, Np)
    grid = (pl.cdiv(B, tB),)

    cost = pl.CostEstimate(
        flops=2 * B * D * Np,
        transcendentals=0,
        bytes_accessed=B * D * 4 + D * Np * 4 + Np * 4 + B * Np * 4,
    )

    out = pl.pallas_call(
        _vae_head_kernel,
        out_shape=jax.ShapeDtypeStruct((B, Np), jnp.float32),
        grid_spec=pltpu.PrefetchScalarGridSpec(
            num_scalar_prefetch=0,
            grid=grid,
            in_specs=[
                pl.BlockSpec((tB, D), lambda i: (i, 0)),    # x: streamed per tile
                pl.BlockSpec((D, Np), lambda i: (0, 0)),    # W: VMEM-resident
                pl.BlockSpec((1, Np), lambda i: (0, 0)),    # bias: VMEM-resident
            ],
            out_specs=pl.BlockSpec((tB, Np), lambda i: (i, 0)),
        ),
        compiler_params=pltpu.CompilerParams(
            dimension_semantics=("parallel",),
            vmem_limit_bytes=32 * 1024 * 1024,
        ),
        cost_estimate=cost,
    )(x_flat, w_p, b_p)

    mu = out[:, :out_dim]
    logvar = out[:, out_dim:N]
    return mu, logvar


if __name__ == "__main__":
    # Module hyperparameters (small, consistent with the __init__ signature)
    latent_dim = 32
    latent_private = None
    data_dim = (4, 16, 16)  # (C, H, W)
    out_dim = latent_dim + (latent_private if latent_private is not None else 0)

    B = 2
    C, H, W = data_dim
    D = C * H * W
    N = 2 * out_dim

    key = jax.random.PRNGKey(0)
    kx, kw, kb = jax.random.split(key, 3)

    x = jax.random.normal(kx, (B, C, H, W), dtype=jnp.float32)
    # Deterministic synthetic parameters (single linear head -> [mu | logvar])
    w = jax.random.normal(kw, (D, N), dtype=jnp.float32) * 0.02
    b = jax.random.normal(kb, (N,), dtype=jnp.float32) * 0.01

    # Parameters are padded once (init-time), not per forward call.
    w_p, b_p = prepare_vae_head_params(w, b)

    mu, logvar = vae_component_forward(x, w_p, b_p, out_dim)
    jax.block_until_ready((mu, logvar))

    # Reference in plain JAX (f32 end to end, same as torch.nn.Linear semantics)
    ref = jnp.dot(x.reshape(B, D), w, preferred_element_type=jnp.float32) + b
    ref_mu, ref_lv = ref[:, :out_dim], ref[:, out_dim:]

    assert mu.shape == (B, out_dim) and logvar.shape == (B, out_dim)
    assert jnp.allclose(mu, ref_mu, atol=1e-3, rtol=1e-3)
    assert jnp.allclose(logvar, ref_lv, atol=1e-3, rtol=1e-3)

    print("KERNEL_OK")
</pallas_src>

<mosaic_0001>
module attributes {stable_mosaic.version = 11 : i64} {
  func.func @_vae_head_kernel(%arg0: i32, %arg1: memref<2x1024xf32, #tpu.memory_space<vmem>>, %arg2: memref<1024x128xf32, #tpu.memory_space<vmem>>, %arg3: memref<1x128xf32, #tpu.memory_space<vmem>>, %arg4: memref<2x128xf32, #tpu.memory_space<vmem>>) attributes {dimension_semantics = [#tpu.dimension_semantics<parallel>], iteration_bounds = array<i64: 1>, scalar_prefetch = 0 : i64, scratch_operands = 0 : i64, tpu.core_type = #tpu.core_type<tc>, window_params = [{transform_indices = @transform_0, window_bounds = array<i64: 2, 1024>}, {pipeline_mode = #tpu.pipeline_mode<synchronous>, transform_indices = @transform_1, window_bounds = array<i64: 1024, 128>}, {pipeline_mode = #tpu.pipeline_mode<synchronous>, transform_indices = @transform_2, window_bounds = array<i64: 1, 128>}, {transform_indices = @transform_3, window_bounds = array<i64: 2, 128>}]} {
    %c0 = arith.constant 0 : index
    %c0_0 = arith.constant 0 : index
    %0 = vector.load %arg3[%c0, %c0_0] : memref<1x128xf32, #tpu.memory_space<vmem>>, vector<1x128xf32>
    %c0_1 = arith.constant 0 : index
    %c0_2 = arith.constant 0 : index
    %1 = vector.load %arg1[%c0_1, %c0_2] : memref<2x1024xf32, #tpu.memory_space<vmem>>, vector<2x1024xf32>
    %c0_3 = arith.constant 0 : index
    %c0_4 = arith.constant 0 : index
    %2 = vector.load %arg2[%c0_3, %c0_4] : memref<1024x128xf32, #tpu.memory_space<vmem>>, vector<1024x128xf32>
    %cst = arith.constant dense<0.000000e+00> : vector<2x128xf32>
    %3 = tpu.matmul %1, %2, %cst {dimension_numbers = #tpu.dot_dimension_numbers<[1], [0], [0], [1], [0, 0, 1, 1], [], []>} : vector<2x1024xf32>, vector<1024x128xf32>, vector<2x128xf32> -> vector<2x128xf32>
    %4 = vector.broadcast %0 : vector<1x128xf32> to vector<2x128xf32>
    %5 = arith.addf %4, %3 : vector<2x128xf32>
    %c0_5 = arith.constant 0 : index
    %c0_6 = arith.constant 0 : index
    %6 = vector.load %arg4[%c0_5, %c0_6] : memref<2x128xf32, #tpu.memory_space<vmem>>, vector<2x128xf32>
    tpu.vector_store %arg4[%c0_5, %c0_6], %5 {strides = array<i32>} : memref<2x128xf32, #tpu.memory_space<vmem>>, vector<2x128xf32>,
    return
  }
  func.func @transform_0(%arg0: i32) -> (i32, i32) {
    %c0_i32 = arith.constant 0 : i32
    %c0_i32_0 = arith.constant 0 : i32
    return %arg0, %c0_i32 : i32, i32
  }
  func.func @transform_1(%arg0: i32) -> (i32, i32) {
    %c0_i32 = arith.constant 0 : i32
    %c0_i32_0 = arith.constant 0 : i32
    %c0_i32_1 = arith.constant 0 : i32
    return %c0_i32, %c0_i32_0 : i32, i32
  }
  func.func @transform_2(%arg0: i32) -> (i32, i32) {
    %c0_i32 = arith.constant 0 : i32
    %c0_i32_0 = arith.constant 0 : i32
    %c0_i32_1 = arith.constant 0 : i32
    return %c0_i32, %c0_i32_0 : i32, i32
  }
  func.func @transform_3(%arg0: i32) -> (i32, i32) {
    %c0_i32 = arith.constant 0 : i32
    %c0_i32_0 = arith.constant 0 : i32
    return %arg0, %c0_i32 : i32, i32
  }
}

</mosaic_0001>

<llo_original>
// kernel: tpu_custom_call.1
$region0: #{tpu_custom_call.1}
  #allocation0 [shape = 'u32[]', space=smem, size = 0x4, offset = 0x4, fixed_abs, tag = 'smem constant byte address 0x4 - core index']
  #allocation1 [shape = 'u32[144,128]{1,0:T(1,128)}', space=vmem, size = 0x12000, scoped, tag = 'internal scratch']
  %s0 = inlined_call_operand.hbm [shape: f32[2,1024], index: 0, kind: input, shape index: {}]
  %s1 = inlined_call_operand.hbm [shape: f32[1024,128], index: 1, kind: input, shape index: {}]
  %s2 = inlined_call_operand.vmem [shape: f32[1,128], index: 2, kind: input, shape index: {}]
  %s3 = inlined_call_operand.hbm [shape: f32[2,128], index: 3, kind: output, shape index: {}]
  %s4 = sld [smem:[#allocation0]]
  $region30: #{tpu_custom_call.1} parent=0
    _
  %s6 = ssub.s32 1, %s4
  %s7 = scalar_select 0, %s6, %s4
  $region1: #{tpu_custom_call.1} parent=0
    #allocation2 [shape = 'u8[8192]{0}', space=vmem, size = 0x2000, scoped, tag = 'input window, operand 0, single buffered']
    #allocation3 [shape = 's32[1]{0}', space=sflag, size = 0x4, scoped, tag = 'scoped memory for tpu_custom_call.1']
    #allocation4 [shape = 's32[1]{0}', space=sflag, size = 0x4, scoped, tag = 'scoped memory for tpu_custom_call.1']
    #allocation5 [shape = 'u8[524288]{0}', space=vmem, size = 0x80000, scoped, tag = 'input window, operand 1, single buffered']
    #allocation6 [shape = 's32[1]{0}', space=sflag, size = 0x4, scoped, tag = 'scoped memory for tpu_custom_call.1']
    #allocation7 [shape = 'u8[1024]{0}', space=vmem, size = 0x400, scoped, tag = 'output window, operand 0, single buffered']
    %8 = vsyncpa [#allocation3], 0
    %9 = vsyncpa [#allocation6], 0
    %10 = vsyncpa [#allocation4], 0
    // Predicated region
    $region2: #{tpu_custom_call.1} parent=1 // pred_check
      _
    $region3: #{tpu_custom_call.1} parent=1 // pred_check_branch
      %12 = sbr.rel (0) target = $region5
    $region4: #{tpu_custom_call.1} parent=1 // pred_region
      %s14 = ssub.s32 256, 256
      %15 = vsyncadd [#allocation3], %s14
      %s17 = sshll.u32 [#allocation2], 4
      %s18 = int_to_ptr.vmem [resolvable:$true] %s17
      %20 = dma.hbm_to_vmem [thread:$0]  %s0, 256, %s18, [#allocation3]
    $region5: #{tpu_custom_call.1} parent=1 // pred_fallthru
      _
    // Predicated region
    $region6: #{tpu_custom_call.1} parent=1 // pred_check
      _
    $region7: #{tpu_custom_call.1} parent=1 // pred_check_branch
      %22 = sbr.rel (0) target = $region9
    $region8: #{tpu_custom_call.1} parent=1 // pred_region
      %s24 = ssub.s32 16384, 16384
      %25 = vsyncadd [#allocation6], %s24
      %s26 = sshll.u32 [#allocation5], 4
      %s27 = int_to_ptr.vmem [resolvable:$true] %s26
      %32 = dma.hbm_to_vmem [thread:$0]  %s1, 16384, %s27, [#allocation6], 128, 128, 8
    $region9: #{tpu_custom_call.1} parent=1 // pred_fallthru
      _
    // Predicated region
    $region10: #{tpu_custom_call.1} parent=1 // pred_check
      _
    $region11: #{tpu_custom_call.1} parent=1 // pred_check_branch
      %34 = sbr.rel (0) target = $region13
    $region12: #{tpu_custom_call.1} parent=1 // pred_region
      _
    $region13: #{tpu_custom_call.1} parent=1 // pred_fallthru
      _
    // Predicated region
    $region14: #{tpu_custom_call.1} parent=1 // pred_check
      _
    $region15: #{tpu_custom_call.1} parent=1 // pred_check_branch
      %36 = sbr.rel (0) target = $region17
    $region16: #{tpu_custom_call.1} parent=1 // pred_region
      %37 = dma.done [#allocation3], 256
    $region17: #{tpu_custom_call.1} parent=1 // pred_fallthru
      _
    // Predicated region
    $region18: #{tpu_custom_call.1} parent=1 // pred_check
      _
    $region19: #{tpu_custom_call.1} parent=1 // pred_check_branch
      %39 = sbr.rel (0) target = $region21
    $region20: #{tpu_custom_call.1} parent=1 // pred_region
      %40 = dma.done [#allocation6], 16384
    $region21: #{tpu_custom_call.1} parent=1 // pred_fallthru
      _
    %v41 = vld [vmem:[%s2] sm:$0x1]
    %v42 = vld [vmem:[#allocation2] sm:$0xff]
    %v43 = vld [vmem:[#allocation2 + $0x8] sm:$0xff]
    %v44 = vld [vmem:[#allocation5] sm:$0xff]
    %v45 = vld [vmem:[#allocation5 + $0x8] sm:$0xff]
    %v46 = vld [vmem:[#allocation5 + $0x10] sm:$0xff]
    %v47 = vld [vmem:[#allocation5 + $0x18] sm:$0xff]
    %v48 = vld [vmem:[#allocation5 + $0x20] sm:$0xff]
    %v49 = vld [vmem:[#allocation5 + $0x28] sm:$0xff]
    %v50 = vld [vmem:[#allocation5 + $0x30] sm:$0xff]
    %v51 = vld [vmem:[#allocation5 + $0x38] sm:$0xff]
    %v52 = vld [vmem:[#allocation5 + $0x40] sm:$0xff]
    %v53 = vld [vmem:[#allocation5 + $0x48] sm:$0xff]
    %v54 = vld [vmem:[#allocation5 + $0x50] sm:$0xff]
    %v55 = vld [vmem:[#allocation5 + $0x58] sm:$0xff]
    %v56 = vld [vmem:[#allocation5 + $0x60] sm:$0xff]
    %v57 = vld [vmem:[#allocation5 + $0x68] sm:$0xff]
    %v58 = vld [vmem:[#allocation5 + $0x70] sm:$0xff]
    %v59 = vld [vmem:[#allocation5 + $0x78] sm:$0xff]
    %v60 = vld [vmem:[#allocation5 + $0x80] sm:$0xff]
    %v61 = vld [vmem:[#allocation5 + $0x88] sm:$0xff]
    %v62 = vld [vmem:[#allocation5 + $0x90] sm:$0xff]
    %v63 = vld [vmem:[#allocation5 + $0x98] sm:$0xff]
    %v64 = vld [vmem:[#allocation5 + $0xa0] sm:$0xff]
    %v65 = vld [vmem:[#allocation5 + $0xa8] sm:$0xff]
    %v66 = vld [vmem:[#allocation5 + $0xb0] sm:$0xff]
    %v67 = vld [vmem:[#allocation5 + $0xb8] sm:$0xff]
    %v68 = vld [vmem:[#allocation5 + $0xc0] sm:$0xff]
    %v69 = vld [vmem:[#allocation5 + $0xc8] sm:$0xff]
    %v70 = vld [vmem:[#allocation5 + $0xd0] sm:$0xff]
    %v71 = vld [vmem:[#allocation5 + $0xd8] sm:$0xff]
    %v72 = vld [vmem:[#allocation5 + $0xe0] sm:$0xff]
    %v73 = vld [vmem:[#allocation5 + $0xe8] sm:$0xff]
    %v74 = vld [vmem:[#allocation5 + $0xf0] sm:$0xff]
    %v75 = vld [vmem:[#allocation5 + $0xf8] sm:$0xff]
    %v76 = vld [vmem:[#allocation5 + $0x100] sm:$0xff]
    %v77 = vld [vmem:[#allocation5 + $0x108] sm:$0xff]
    %v78 = vld [vmem:[#allocation5 + $0x110] sm:$0xff]
    %v79 = vld [vmem:[#allocation5 + $0x118] sm:$0xff]
    %v80 = vld [vmem:[#allocation5 + $0x120] sm:$0xff]
    %v81 = vld [vmem:[#allocation5 + $0x128] sm:$0xff]
    %v82 = vld [vmem:[#allocation5 + $0x130] sm:$0xff]
    %v83 = vld [vmem:[#allocation5 + $0x138] sm:$0xff]
    %v84 = vld [vmem:[#allocation5 + $0x140] sm:$0xff]
    %v85 = vld [vmem:[#allocation5 + $0x148] sm:$0xff]
    %v86 = vld [vmem:[#allocation5 + $0x150] sm:$0xff]
    %v87 = vld [vmem:[#allocation5 + $0x158] sm:$0xff]
    %v88 = vld [vmem:[#allocation5 + $0x160] sm:$0xff]
    %v89 = vld [vmem:[#allocation5 + $0x168] sm:$0xff]
    %v90 = vld [vmem:[#allocation5 + $0x170] sm:$0xff]
    %v91 = vld [vmem:[#allocation5 + $0x178] sm:$0xff]
    %v92 = vld [vmem:[#allocation5 + $0x180] sm:$0xff]
    %v93 = vld [vmem:[#allocation5 + $0x188] sm:$0xff]
    %v94 = vld [vmem:[#allocation5 + $0x190] sm:$0xff]
    %v95 = vld [vmem:[#allocation5 + $0x198] sm:$0xff]
    %v96 = vld [vmem:[#allocation5 + $0x1a0] sm:$0xff]
    %v97 = vld [vmem:[#allocation5 + $0x1a8] sm:$0xff]
    %v98 = vld [vmem:[#allocation5 + $0x1b0] sm:$0xff]
    %v99 = vld [vmem:[#allocation5 + $0x1b8] sm:$0xff]
    %v100 = vld [vmem:[#allocation5 + $0x1c0] sm:$0xff]
    %v101 = vld [vmem:[#allocation5 + $0x1c8] sm:$0xff]
    %v102 = vld [vmem:[#allocation5 + $0x1d0] sm:$0xff]
    %v103 = vld [vmem:[#allocation5 + $0x1d8] sm:$0xff]
    %v104 = vld [vmem:[#allocation5 + $0x1e0] sm:$0xff]
    %v105 = vld [vmem:[#allocation5 + $0x1e8] sm:$0xff]
    %v106 = vld [vmem:[#allocation5 + $0x1f0] sm:$0xff]
    %v107 = vld [vmem:[#allocation5 + $0x1f8] sm:$0xff]
    %v108 = vld [vmem:[#allocation5 + $0x200] sm:$0xff]
    %v109 = vld [vmem:[#allocation5 + $0x208] sm:$0xff]
    %v110 = vld [vmem:[#allocation5 + $0x210] sm:$0xff]
    %v111 = vld [vmem:[#allocation5 + $0x218] sm:$0xff]
    %v112 = vld [vmem:[#allocation5 + $0x220] sm:$0xff]
    %v113 = vld [vmem:[#allocation5 + $0x228] sm:$0xff]
    %v114 = vld [vmem:[#allocation5 + $0x230] sm:$0xff]
    %v115 = vld [vmem:[#allocation5 + $0x238] sm:$0xff]
    %v116 = vld [vmem:[#allocation5 + $0x240] sm:$0xff]
    %v117 = vld [vmem:[#allocation5 + $0x248] sm:$0xff]
    %v118 = vld [vmem:[#allocation5 + $0x250] sm:$0xff]
    %v119 = vld [vmem:[#allocation5 + $0x258] sm:$0xff]
    %v120 = vld [vmem:[#allocation5 + $0x260] sm:$0xff]
    %v121 = vld [vmem:[#allocation5 + $0x268] sm:$0xff]
    %v122 = vld [vmem:[#allocation5 + $0x270] sm:$0xff]
    %v123 = vld [vmem:[#allocation5 + $0x278] sm:$0xff]
    %v124 = vld [vmem:[#allocation5 + $0x280] sm:$0xff]
    %v125 = vld [vmem:[#allocation5 + $0x288] sm:$0xff]
    %v126 = vld [vmem:[#allocation5 + $0x290] sm:$0xff]
    %v127 = vld [vmem:[#allocation5 + $0x298] sm:$0xff]
    %v128 = vld [vmem:[#allocation5 + $0x2a0] sm:$0xff]
    %v129 = vld [vmem:[#allocation5 + $0x2a8] sm:$0xff]
    %v130 = vld [vmem:[#allocation5 + $0x2b0] sm:$0xff]
    %v131 = vld [vmem:[#allocation5 + $0x2b8] sm:$0xff]
    %v132 = vld [vmem:[#allocation5 + $0x2c0] sm:$0xff]
    %v133 = vld [vmem:[#allocation5 + $0x2c8] sm:$0xff]
    %v134 = vld [vmem:[#allocation5 + $0x2d0] sm:$0xff]
    %v135 = vld [vmem:[#allocation5 + $0x2d8] sm:$0xff]
    %v136 = vld [vmem:[#allocation5 + $0x2e0] sm:$0xff]
    %v137 = vld [vmem:[#allocation5 + $0x2e8] sm:$0xff]
    %v138 = vld [vmem:[#allocation5 + $0x2f0] sm:$0xff]
    %v139 = vld [vmem:[#allocation5 + $0x2f8] sm:$0xff]
    %v140 = vld [vmem:[#allocation5 + $0x300] sm:$0xff]
    %v141 = vld [vmem:[#allocation5 + $0x308] sm:$0xff]
    %v142 = vld [vmem:[#allocation5 + $0x310] sm:$0xff]
    %v143 = vld [vmem:[#allocation5 + $0x318] sm:$0xff]
    %v144 = vld [vmem:[#allocation5 + $0x320] sm:$0xff]
    %v145 = vld [vmem:[#allocation5 + $0x328] sm:$0xff]
    %v146 = vld [vmem:[#allocation5 + $0x330] sm:$0xff]
    %v147 = vld [vmem:[#allocation5 + $0x338] sm:$0xff]
    %v148 = vld [vmem:[#allocation5 + $0x340] sm:$0xff]
    %v149 = vld [vmem:[#allocation5 + $0x348] sm:$0xff]
    %v150 = vld [vmem:[#allocation5 + $0x350] sm:$0xff]
    %v151 = vld [vmem:[#allocation5 + $0x358] sm:$0xff]
    %v152 = vld [vmem:[#allocation5 + $0x360] sm:$0xff]
    %v153 = vld [vmem:[#allocation5 + $0x368] sm:$0xff]
    %v154 = vld [vmem:[#allocation5 + $0x370] sm:$0xff]
    %v155 = vld [vmem:[#allocation5 + $0x378] sm:$0xff]
    %v156 = vld [vmem:[#allocation5 + $0x380] sm:$0xff]
    %v157 = vld [vmem:[#allocation5 + $0x388] sm:$0xff]
    %v158 = vld [vmem:[#allocation5 + $0x390] sm:$0xff]
    %v159 = vld [vmem:[#allocation5 + $0x398] sm:$0xff]
    %v160 = vld [vmem:[#allocation5 + $0x3a0] sm:$0xff]
    %v161 = vld [vmem:[#allocation5 + $0x3a8] sm:$0xff]
    %v162 = vld [vmem:[#allocation5 + $0x3b0] sm:$0xff]
    %v163 = vld [vmem:[#allocation5 + $0x3b8] sm:$0xff]
    %v164 = vld [vmem:[#allocation5 + $0x3c0] sm:$0xff]
    %v165 = vld [vmem:[#allocation5 + $0x3c8] sm:$0xff]
    %v166 = vld [vmem:[#allocation5 + $0x3d0] sm:$0xff]
    %v167 = vld [vmem:[#allocation5 + $0x3d8] sm:$0xff]
    %v168 = vld [vmem:[#allocation5 + $0x3e0] sm:$0xff]
    %v169 = vld [vmem:[#allocation5 + $0x3e8] sm:$0xff]
    %v170 = vld [vmem:[#allocation5 + $0x3f0] sm:$0xff]
    %v171 = vld [vmem:[#allocation5 + $0x3f8] sm:$0xff]
    %v174 = vcombine.high %v42, %v42
    %v176 = vunpack.c.l.s4 1983009808
    %v177 = vunpack.c.0.s8 %v176
    %v178 = vlaneseq
    %v179 = vshrl.u32 %v178, 7
    %v180 = vsub.s32 %v177, %v179
    %v181 = vrot.slane %v42, %v180
    %v183 = vunpack.c.l.s4 1983009808
    %v184 = vunpack.c.0.s8 %v183
    %v185 = vlaneseq
    %v186 = vshrl.u32 %v185, 7
    %v187 = vsub.s32 %v184, %v186
    %v188 = vrot.slane %v174, %v187
    %v189 = vcombine.high %v181, %v181
    %v190 = vcombine.high %v188, %v188
    %v191 = vcombine.high %v43, %v43
    %v193 = vunpack.c.l.s4 1983009808
    %v194 = vunpack.c.0.s8 %v193
    %v195 = vlaneseq
    %v196 = vshrl.u32 %v195, 7
    %v197 = vsub.s32 %v194, %v196
    %v198 = vrot.slane %v43, %v197
    %v200 = vunpack.c.l.s4 1983009808
    %v201 = vunpack.c.0.s8 %v200
    %v202 = vlaneseq
    %v203 = vshrl.u32 %v202, 7
    %v204 = vsub.s32 %v201, %v203
    %v205 = vrot.slane %v191, %v204
    %v206 = vcombine.high %v198, %v198
    %v207 = vcombine.high %v205, %v205
    %216 = vmatprep.subr.mxu0 0.0
    %217 = vmatpush1.msra.mxu0 %v44
    %218 = vmatprep.subr.mxu0 0.0
    %219 = vmatpush1.msra.mxu0 %v45
    %220 = vmatprep.subr.mxu0 0.0
    %221 = vmatpush1.msra.mxu0 %v46
    %222 = vmatprep.subr.mxu0 0.0
    %223 = vmatpush1.msra.mxu0 %v47
    %224 = vmatprep.subr.mxu0 0.0
    %225 = vmatpush1.msra.mxu0 %v48
    %226 = vmatprep.subr.mxu0 0.0
    %227 = vmatpush1.msra.mxu0 %v49
    %228 = vmatprep.subr.mxu0 0.0
    %229 = vmatpush1.msra.mxu0 %v50
    %230 = vmatprep.subr.mxu0 0.0
    %231 = vmatpush1.msra.mxu0 %v51
    %232 = vmatprep.subr.mxu0 0.0
    %233 = vmatpush1.msra.mxu0 %v52
    %234 = vmatprep.subr.mxu0 0.0
    %235 = vmatpush1.msra.mxu0 %v53
    %236 = vmatprep.subr.mxu0 0.0
    %237 = vmatpush1.msra.mxu0 %v54
    %238 = vmatprep.subr.mxu0 0.0
    %239 = vmatpush1.msra.mxu0 %v55
    %240 = vmatprep.subr.mxu0 0.0
    %241 = vmatpush1.msra.mxu0 %v56
    %242 = vmatprep.subr.mxu0 0.0
    %243 = vmatpush1.msra.mxu0 %v57
    %244 = vmatprep.subr.mxu0 0.0
    %245 = vmatpush1.msra.mxu0 %v58
    %246 = vmatprep.subr.mxu0 0.0
    %247 = vmatpush1.msra.mxu0 %v59
    %248 = vmatprep.subr.mxu0 0.0
    %249 = vmatpush1.msra.mxu0 %v60
    %250 = vmatprep.subr.mxu0 0.0
    %251 = vmatpush1.msra.mxu0 %v61
    %252 = vmatprep.subr.mxu0 0.0
    %253 = vmatpush1.msra.mxu0 %v62
    %254 = vmatprep.subr.mxu0 0.0
    %255 = vmatpush1.msra.mxu0 %v63
    %256 = vmatprep.subr.mxu0 0.0
    %257 = vmatpush1.msra.mxu0 %v64
    %258 = vmatprep.subr.mxu0 0.0
    %259 = vmatpush1.msra.mxu0 %v65
    %260 = vmatprep.subr.mxu0 0.0
    %261 = vmatpush1.msra.mxu0 %v66
    %262 = vmatprep.subr.mxu0 0.0
    %263 = vmatpush1.msra.mxu0 %v67
    %264 = vmatprep.subr.mxu0 0.0
    %265 = vmatpush1.msra.mxu0 %v68
    %266 = vmatprep.subr.mxu0 0.0
    %267 = vmatpush1.msra.mxu0 %v69
    %268 = vmatprep.subr.mxu0 0.0
    %269 = vmatpush1.msra.mxu0 %v70
    %270 = vmatprep.subr.mxu0 0.0
    %271 = vmatpush1.msra.mxu0 %v71
    %272 = vmatprep.subr.mxu0 0.0
    %273 = vmatpush1.msra.mxu0 %v72
    %274 = vmatprep.subr.mxu0 0.0
    %275 = vmatpush1.msra.mxu0 %v73
    %276 = vmatprep.subr.mxu0 0.0
    %277 = vmatpush1.msra.mxu0 %v74
    %278 = vmatprep.subr.mxu0 0.0
    %279 = vmatpush1.msra.mxu0 %v75
    %280 = vmatprep.mubr.f32.mxu0 %v189
    %281 = vmatmul.mubr.f32.gmra.mrb[0].mxu0 %v181
    %v282 = vpop.f32.mrb[0].mxu0
    %v283 = vadd.f32 0.0, %v282
    %v284 = vpop.f32.mrb[0].mxu0
    %285 = vdwg.mxu0
    %286 = vmatprep.subr.mxu0 0.0
    %287 = vmatpush1.msra.mxu0 %v76
    %288 = vmatprep.subr.mxu0 0.0
    %289 = vmatpush1.msra.mxu0 %v77
    %290 = vmatprep.subr.mxu0 0.0
    %291 = vmatpush1.msra.mxu0 %v78
    %292 = vmatprep.subr.mxu0 0.0
    %293 = vmatpush1.msra.mxu0 %v79
    %294 = vmatprep.subr.mxu0 0.0
    %295 = vmatpush1.msra.mxu0 %v80
    %296 = vmatprep.subr.mxu0 0.0
    %297 = vmatpush1.msra.mxu0 %v81
    %298 = vmatprep.subr.mxu0 0.0
    %299 = vmatpush1.msra.mxu0 %v82
    %300 = vmatprep.subr.mxu0 0.0
    %301 = vmatpush1.msra.mxu0 %v83
    %302 = vmatprep.subr.mxu0 0.0
    %303 = vmatpush1.msra.mxu0 %v84
    %304 = vmatprep.subr.mxu0 0.0
    %305 = vmatpush1.msra.mxu0 %v85
    %306 = vmatprep.subr.mxu0 0.0
    %307 = vmatpush1.msra.mxu0 %v86
    %308 = vmatprep.subr.mxu0 0.0
    %309 = vmatpush1.msra.mxu0 %v87
    %310 = vmatprep.subr.mxu0 0.0
    %311 = vmatpush1.msra.mxu0 %v88
    %312 = vmatprep.subr.mxu0 0.0
    %313 = vmatpush1.msra.mxu0 %v89
    %314 = vmatprep.subr.mxu0 0.0
    %315 = vmatpush1.msra.mxu0 %v90
    %316 = vmatprep.subr.mxu0 0.0
    %317 = vmatpush1.msra.mxu0 %v91
    %318 = vmatprep.subr.mxu0 0.0
    %319 = vmatpush1.msra.mxu0 %v92
    %320 = vmatprep.subr.mxu0 0.0
    %321 = vmatpush1.msra.mxu0 %v93
    %322 = vmatprep.subr.mxu0 0.0
    %323 = vmatpush1.msra.mxu0 %v94
    %324 = vmatprep.subr.mxu0 0.0
    %325 = vmatpush1.msra.mxu0 %v95
    %326 = vmatprep.subr.mxu0 0.0
    %327 = vmatpush1.msra.mxu0 %v96
    %328 = vmatprep.subr.mxu0 0.0
    %329 = vmatpush1.msra.mxu0 %v97
    %330 = vmatprep.subr.mxu0 0.0
    %331 = vmatpush1.msra.mxu0 %v98
    %332 = vmatprep.subr.mxu0 0.0
    %333 = vmatpush1.msra.mxu0 %v99
    %334 = vmatprep.subr.mxu0 0.0
    %335 = vmatpush1.msra.mxu0 %v100
    %336 = vmatprep.subr.mxu0 0.0
    %337 = vmatpush1.msra.mxu0 %v101
    %338 = vmatprep.subr.mxu0 0.0
    %339 = vmatpush1.msra.mxu0 %v102
    %340 = vmatprep.subr.mxu0 0.0
    %341 = vmatpush1.msra.mxu0 %v103
    %342 = vmatprep.subr.mxu0 0.0
    %343 = vmatpush1.msra.mxu0 %v104
    %344 = vmatprep.subr.mxu0 0.0
    %345 = vmatpush1.msra.mxu0 %v105
    %346 = vmatprep.subr.mxu0 0.0
    %347 = vmatpush1.msra.mxu0 %v106
    %348 = vmatprep.subr.mxu0 0.0
    %349 = vmatpush1.msra.mxu0 %v107
    %350 = vmatprep.mubr.f32.mxu0 %v190
    %351 = vmatmul.mubr.f32.gmra.mrb[0].mxu0 %v188
    %v352 = vpop.f32.mrb[0].mxu0
    %v353 = vadd.f32 %v283, %v352
    %v354 = vpop.f32.mrb[0].mxu0
    %355 = vdwg.mxu0
    %356 = vmatprep.subr.mxu0 0.0
    %357 = vmatpush1.msra.mxu0 %v108
    %358 = vmatprep.subr.mxu0 0.0
    %359 = vmatpush1.msra.mxu0 %v109
    %360 = vmatprep.subr.mxu0 0.0
    %361 = vmatpush1.msra.mxu0 %v110
    %362 = vmatprep.subr.mxu0 0.0
    %363 = vmatpush1.msra.mxu0 %v111
    %364 = vmatprep.subr.mxu0 0.0
    %365 = vmatpush1.msra.mxu0 %v112
    %366 = vmatprep.subr.mxu0 0.0
    %367 = vmatpush1.msra.mxu0 %v113
    %368 = vmatprep.subr.mxu0 0.0
    %369 = vmatpush1.msra.mxu0 %v114
    %370 = vmatprep.subr.mxu0 0.0
    %371 = vmatpush1.msra.mxu0 %v115
    %372 = vmatprep.subr.mxu0 0.0
    %373 = vmatpush1.msra.mxu0 %v116
    %374 = vmatprep.subr.mxu0 0.0
    %375 = vmatpush1.msra.mxu0 %v117
    %376 = vmatprep.subr.mxu0 0.0
    %377 = vmatpush1.msra.mxu0 %v118
    %378 = vmatprep.subr.mxu0 0.0
    %379 = vmatpush1.msra.mxu0 %v119
    %380 = vmatprep.subr.mxu0 0.0
    %381 = vmatpush1.msra.mxu0 %v120
    %382 = vmatprep.subr.mxu0 0.0
    %383 = vmatpush1.msra.mxu0 %v121
    %384 = vmatprep.subr.mxu0 0.0
    %385 = vmatpush1.msra.mxu0 %v122
    %386 = vmatprep.subr.mxu0 0.0
    %387 = vmatpush1.msra.mxu0 %v123
    %388 = vmatprep.subr.mxu0 0.0
    %389 = vmatpush1.msra.mxu0 %v124
    %390 = vmatprep.subr.mxu0 0.0
    %391 = vmatpush1.msra.mxu0 %v125
    %392 = vmatprep.subr.mxu0 0.0
    %393 = vmatpush1.msra.mxu0 %v126
    %394 = vmatprep.subr.mxu0 0.0
    %395 = vmatpush1.msra.mxu0 %v127
    %396 = vmatprep.subr.mxu0 0.0
    %397 = vmatpush1.msra.mxu0 %v128
    %398 = vmatprep.subr.mxu0 0.0
    %399 = vmatpush1.msra.mxu0 %v129
    %400 = vmatprep.subr.mxu0 0.0
    %401 = vmatpush1.msra.mxu0 %v130
    %402 = vmatprep.subr.mxu0 0.0
    %403 = vmatpush1.msra.mxu0 %v131
    %404 = vmatprep.subr.mxu0 0.0
    %405 = vmatpush1.msra.mxu0 %v132
    %406 = vmatprep.subr.mxu0 0.0
    %407 = vmatpush1.msra.mxu0 %v133
    %408 = vmatprep.subr.mxu0 0.0
    %409 = vmatpush1.msra.mxu0 %v134
    %410 = vmatprep.subr.mxu0 0.0
    %411 = vmatpush1.msra.mxu0 %v135
    %412 = vmatprep.subr.mxu0 0.0
    %413 = vmatpush1.msra.mxu0 %v136
    %414 = vmatprep.subr.mxu0 0.0
    %415 = vmatpush1.msra.mxu0 %v137
    %416 = vmatprep.subr.mxu0 0.0
    %417 = vmatpush1.msra.mxu0 %v138
    %418 = vmatprep.subr.mxu0 0.0
    %419 = vmatpush1.msra.mxu0 %v139
    %420 = vmatprep.mubr.f32.mxu0 %v206
    %421 = vmatmul.mubr.f32.gmra.mrb[0].mxu0 %v198
    %v422 = vpop.f32.mrb[0].mxu0
    %v423 = vadd.f32 %v353, %v422
    %v424 = vpop.f32.mrb[0].mxu0
    %425 = vdwg.mxu0
    %426 = vmatprep.subr.mxu0 0.0
    %427 = vmatpush1.msra.mxu0 %v140
    %428 = vmatprep.subr.mxu0 0.0
    %429 = vmatpush1.msra.mxu0 %v141
    %430 = vmatprep.subr.mxu0 0.0
    %431 = vmatpush1.msra.mxu0 %v142
    %432 = vmatprep.subr.mxu0 0.0
    %433 = vmatpush1.msra.mxu0 %v143
    %434 = vmatprep.subr.mxu0 0.0
    %435 = vmatpush1.msra.mxu0 %v144
    %436 = vmatprep.subr.mxu0 0.0
    %437 = vmatpush1.msra.mxu0 %v145
    %438 = vmatprep.subr.mxu0 0.0
    %439 = vmatpush1.msra.mxu0 %v146
    %440 = vmatprep.subr.mxu0 0.0
    %441 = vmatpush1.msra.mxu0 %v147
    %442 = vmatprep.subr.mxu0 0.0
    %443 = vmatpush1.msra.mxu0 %v148
    %444 = vmatprep.subr.mxu0 0.0
    %445 = vmatpush1.msra.mxu0 %v149
    %446 = vmatprep.subr.mxu0 0.0
    %447 = vmatpush1.msra.mxu0 %v150
    %448 = vmatprep.subr.mxu0 0.0
    %449 = vmatpush1.msra.mxu0 %v151
    %450 = vmatprep.subr.mxu0 0.0
    %451 = vmatpush1.msra.mxu0 %v152
    %452 = vmatprep.subr.mxu0 0.0
    %453 = vmatpush1.msra.mxu0 %v153
    %454 = vmatprep.subr.mxu0 0.0
    %455 = vmatpush1.msra.mxu0 %v154
    %456 = vmatprep.subr.mxu0 0.0
    %457 = vmatpush1.msra.mxu0 %v155
    %458 = vmatprep.subr.mxu0 0.0
    %459 = vmatpush1.msra.mxu0 %v156
    %460 = vmatprep.subr.mxu0 0.0
    %461 = vmatpush1.msra.mxu0 %v157
    %462 = vmatprep.subr.mxu0 0.0
    %463 = vmatpush1.msra.mxu0 %v158
    %464 = vmatprep.subr.mxu0 0.0
    %465 = vmatpush1.msra.mxu0 %v159
    %466 = vmatprep.subr.mxu0 0.0
    %467 = vmatpush1.msra.mxu0 %v160
    %468 = vmatprep.subr.mxu0 0.0
    %469 = vmatpush1.msra.mxu0 %v161
    %470 = vmatprep.subr.mxu0 0.0
    %471 = vmatpush1.msra.mxu0 %v162
    %472 = vmatprep.subr.mxu0 0.0
    %473 = vmatpush1.msra.mxu0 %v163
    %474 = vmatprep.subr.mxu0 0.0
    %475 = vmatpush1.msra.mxu0 %v164
    %476 = vmatprep.subr.mxu0 0.0
    %477 = vmatpush1.msra.mxu0 %v165
    %478 = vmatprep.subr.mxu0 0.0
    %479 = vmatpush1.msra.mxu0 %v166
    %480 = vmatprep.subr.mxu0 0.0
    %481 = vmatpush1.msra.mxu0 %v167
    %482 = vmatprep.subr.mxu0 0.0
    %483 = vmatpush1.msra.mxu0 %v168
    %484 = vmatprep.subr.mxu0 0.0
    %485 = vmatpush1.msra.mxu0 %v169
    %486 = vmatprep.subr.mxu0 0.0
    %487 = vmatpush1.msra.mxu0 %v170
    %488 = vmatprep.subr.mxu0 0.0
    %489 = vmatpush1.msra.mxu0 %v171
    %490 = vmatprep.mubr.f32.mxu0 %v207
    %491 = vmatmul.mubr.f32.gmra.mrb[0].mxu0 %v205
    %v492 = vpop.f32.mrb[0].mxu0
    %v493 = vadd.f32 %v423, %v492
    %v494 = vpop.f32.mrb[0].mxu0
    %495 = vdwg.mxu0
    %v497 = vlaneseq
    %v498 = vshrl.u32 %v497, 7
    %v499 = vsub.s32 0, %v498
    %v500 = vrot.slane %v41, %v499
    %v502 = vadd.f32 %v500, %v493
    %503 = vst [vmem:[#allocation7] sm:$0x3] %v502
    // Predicated region
    $region22: #{tpu_custom_call.1} parent=1 // pred_check
      _
    $region23: #{tpu_custom_call.1} parent=1 // pred_check_branch
      %505 = sbr.rel (0) target = $region25
    $region24: #{tpu_custom_call.1} parent=1 // pred_region
      %s507 = ssub.s32 32, 32
      %508 = vsyncadd [#allocation4], %s507
      %s510 = sshll.u32 [#allocation7], 4
      %s511 = int_to_ptr.vmem [resolvable:$true] %s510
      %513 = dma.vmem_to_hbm [thread:$0]  %s511, 32, %s3, [#allocation4]
    $region25: #{tpu_custom_call.1} parent=1 // pred_fallthru
      _
    // Predicated region
    $region26: #{tpu_custom_call.1} parent=1 // pred_check
      _
    $region27: #{tpu_custom_call.1} parent=1 // pred_check_branch
      %515 = sbr.rel (0) target = $region29
    $region28: #{tpu_custom_call.1} parent=1 // pred_region
      %516 = dma.done [#allocation4], 32
    $region29: #{tpu_custom_call.1} parent=1 // pred_fallthru
      _
    %517 = vsyncpa [#allocation3], 1
    %518 = vsyncpa [#allocation6], 1
    %519 = vsyncpa [#allocation4], 1

</llo_original>
